<compile_context>
chip_gen: v6e
topology: v6e:2x2x1
jax: 0.10.0
libtpu: 0.0.40
codegen_flags: <defaults>
</compile_context>

<pallas_src>
import jax
import jax.numpy as jnp
from jax.experimental import pallas as pl
from jax.experimental.pallas import tpu as pltpu


def lstm_last_step_kernel(x_ref, wih_ref, whh_ref, b_ref, out_ref):
    """Single-invocation LSTM over all T time steps; writes h_T.

    x_ref  : (T, B_pad, D)   time-major input, fully resident in VMEM
    wih_ref: (D, 4H)         W_ih^T
    whh_ref: (H, 4H)         W_hh^T
    b_ref  : (B_pad, 4H)     pre-broadcast (b_ih + b_hh)
    out_ref: (B_pad, H)      h_T  (== sequence_output[:, -1, :])
    """
    T, B_pad, D = x_ref.shape
    H = out_ref.shape[1]
    H4 = 4 * H

    wih = wih_ref[...]      # (D, 4H)   loaded once
    whh = whh_ref[...]      # (H, 4H)   loaded once
    b = b_ref[...]          # (B_pad, 4H)
    x_all = x_ref[...]      # (T, B_pad, D)

    # Input contribution for ALL steps in one MXU call, off the serial chain.
    #   (T*B_pad, D) @ (D, 4H) -> (T, B_pad, 4H), bias added once.
    pre = jnp.dot(x_all.reshape(T * B_pad, D), wih,
                  preferred_element_type=jnp.float32)
    pre = pre.reshape(T, B_pad, H4) + b[None, :, :]

    h = jnp.zeros((B_pad, H), jnp.float32)
    c = jnp.zeros((B_pad, H), jnp.float32)

    # T is small and static -> fully unrolled recurrence, h/c live in vregs.
    # Only the (B_pad, H) @ (H, 4H) recurrent matmul sits on the serial path.
    for t in range(T):
        gates = pre[t] + jnp.dot(h, whh, preferred_element_type=jnp.float32)

        # Two full-width transcendentals (one vreg each) instead of four
        # 32-lane ones; static lane slices pick out the gates.
        sig = jax.nn.sigmoid(gates)
        th = jnp.tanh(gates)
        i = sig[:, 0 * H:1 * H]
        f = sig[:, 1 * H:2 * H]
        g = th[:, 2 * H:3 * H]
        o = sig[:, 3 * H:4 * H]

        c = f * c + i * g
        h = o * jnp.tanh(c)

    out_ref[...] = h.astype(out_ref.dtype)


def rnn_forward(x, w_ih, w_hh, b_ih, b_hh):
    """Equivalent of RNN.forward for rnn_type='LSTM', num_layers=1,
    bidirectional=False, batch_first=True: run the LSTM over x (B, T, D) and
    return output[:, -1, :] -> (B, H)."""
    B, T, D = x.shape
    H4 = w_ih.shape[0]
    H = H4 // 4

    # Pad batch to a full sublane group (8) and go time-major for the kernel.
    B_pad = max(8, ((B + 7) // 8) * 8)
    x_pad = jnp.pad(x, ((0, B_pad - B), (0, 0), (0, 0)))
    x_tbd = jnp.transpose(x_pad, (1, 0, 2))              # (T, B_pad, D)

    wih_t = jnp.transpose(w_ih)                          # (D, 4H)
    whh_t = jnp.transpose(w_hh)                          # (H, 4H)
    b_bcast = jnp.broadcast_to((b_ih + b_hh)[None, :], (B_pad, H4))

    out_pad = pl.pallas_call(
        lstm_last_step_kernel,
        out_shape=jax.ShapeDtypeStruct((B_pad, H), x.dtype),
        in_specs=[
            pl.BlockSpec(memory_space=pltpu.MemorySpace.VMEM),  # x (T, B_pad, D)
            pl.BlockSpec(memory_space=pltpu.MemorySpace.VMEM),  # W_ih^T
            pl.BlockSpec(memory_space=pltpu.MemorySpace.VMEM),  # W_hh^T
            pl.BlockSpec(memory_space=pltpu.MemorySpace.VMEM),  # broadcast bias
        ],
        out_specs=pl.BlockSpec(memory_space=pltpu.MemorySpace.VMEM),
    )(x_tbd, wih_t, whh_t, b_bcast)

    return out_pad[:B]


def rnn_forward_ref(x, w_ih, w_hh, b_ih, b_hh):
    """Pure-JAX reference (PyTorch nn.LSTM semantics) for correctness checking."""
    B, T, D = x.shape
    H = w_hh.shape[1]

    def step(carry, x_t):
        h, c = carry
        gates = x_t @ w_ih.T + b_ih + h @ w_hh.T + b_hh
        i = jax.nn.sigmoid(gates[:, 0 * H:1 * H])
        f = jax.nn.sigmoid(gates[:, 1 * H:2 * H])
        g = jnp.tanh(gates[:, 2 * H:3 * H])
        o = jax.nn.sigmoid(gates[:, 3 * H:4 * H])
        c_new = f * c + i * g
        h_new = o * jnp.tanh(c_new)
        return (h_new, c_new), h_new

    init = (jnp.zeros((B, H), x.dtype), jnp.zeros((B, H), x.dtype))
    (_, _), hs = jax.lax.scan(step, init, jnp.transpose(x, (1, 0, 2)))
    return hs[-1]  # == output[:, -1, :]


if __name__ == "__main__":
    # Small shapes consistent with the module: batch=2, seq=8, input=16, hidden=32.
    B, T, D, H = 2, 8, 16, 32

    key = jax.random.PRNGKey(0)
    kx, k1, k2, k3, k4 = jax.random.split(key, 5)

    # Deterministic init matching nn.LSTM parameter shapes: U(-1/sqrt(H), 1/sqrt(H)).
    k = 1.0 / jnp.sqrt(jnp.float32(H))
    w_ih = jax.random.uniform(k1, (4 * H, D), jnp.float32, -k, k)   # weight_ih_l0
    w_hh = jax.random.uniform(k2, (4 * H, H), jnp.float32, -k, k)   # weight_hh_l0
    b_ih = jax.random.uniform(k3, (4 * H,), jnp.float32, -k, k)     # bias_ih_l0
    b_hh = jax.random.uniform(k4, (4 * H,), jnp.float32, -k, k)     # bias_hh_l0

    x = jax.random.normal(kx, (B, T, D), jnp.float32)               # (B, T, D) batch_first

    out = rnn_forward(x, w_ih, w_hh, b_ih, b_hh)
    out = jax.block_until_ready(out)

    ref = rnn_forward_ref(x, w_ih, w_hh, b_ih, b_hh)
    assert out.shape == (B, H)
    assert jnp.allclose(out, ref, rtol=1e-4, atol=1e-5), "mismatch vs reference"

    print("KERNEL_OK")
</pallas_src>

<mosaic_0001>
module attributes {stable_mosaic.version = 11 : i64} {
  func.func @lstm_last_step_kernel(%arg0: memref<8x8x16xf32, #tpu.memory_space<vmem>>, %arg1: memref<16x128xf32, #tpu.memory_space<vmem>>, %arg2: memref<32x128xf32, #tpu.memory_space<vmem>>, %arg3: memref<8x128xf32, #tpu.memory_space<vmem>>, %arg4: memref<8x32xf32, #tpu.memory_space<vmem>>) attributes {dimension_semantics = [], scalar_prefetch = 0 : i64, scratch_operands = 0 : i64, tpu.core_type = #tpu.core_type<tc>} {
    %c0 = arith.constant 0 : index
    %c0_0 = arith.constant 0 : index
    %0 = vector.load %arg1[%c0, %c0_0] : memref<16x128xf32, #tpu.memory_space<vmem>>, vector<16x128xf32>
    %c0_1 = arith.constant 0 : index
    %c0_2 = arith.constant 0 : index
    %1 = vector.load %arg2[%c0_1, %c0_2] : memref<32x128xf32, #tpu.memory_space<vmem>>, vector<32x128xf32>
    %c0_3 = arith.constant 0 : index
    %c0_4 = arith.constant 0 : index
    %2 = vector.load %arg3[%c0_3, %c0_4] : memref<8x128xf32, #tpu.memory_space<vmem>>, vector<8x128xf32>
    %c0_5 = arith.constant 0 : index
    %c0_6 = arith.constant 0 : index
    %c0_7 = arith.constant 0 : index
    %3 = vector.load %arg0[%c0_5, %c0_6, %c0_7] : memref<8x8x16xf32, #tpu.memory_space<vmem>>, vector<8x8x16xf32>
    %4 = vector.shape_cast %3 : vector<8x8x16xf32> to vector<64x16xf32>
    %cst = arith.constant dense<0.000000e+00> : vector<64x128xf32>
    %5 = tpu.matmul %4, %0, %cst {dimension_numbers = #tpu.dot_dimension_numbers<[1], [0], [0], [1], [0, 0, 1, 1], [], []>} : vector<64x16xf32>, vector<16x128xf32>, vector<64x128xf32> -> vector<64x128xf32>
    %6 = vector.shape_cast %5 : vector<64x128xf32> to vector<8x8x128xf32>
    %7 = vector.shape_cast %2 : vector<8x128xf32> to vector<1x8x128xf32>
    %8 = vector.broadcast %7 : vector<1x8x128xf32> to vector<8x8x128xf32>
    %9 = arith.addf %6, %8 : vector<8x8x128xf32>
    %cst_8 = arith.constant 0.000000e+00 : f32
    %10 = vector.broadcast %cst_8 : f32 to vector<8x32xf32>
    %cst_9 = arith.constant 0.000000e+00 : f32
    %11 = vector.broadcast %cst_9 : f32 to vector<8x32xf32>
    %12 = vector.extract_strided_slice %9 {offsets = [0, 0, 0], sizes = [1, 8, 128], strides = [1, 1, 1]} : vector<8x8x128xf32> to vector<1x8x128xf32>
    %13 = vector.shape_cast %12 : vector<1x8x128xf32> to vector<8x128xf32>
    %cst_10 = arith.constant dense<0.000000e+00> : vector<8x128xf32>
    %14 = tpu.matmul %10, %1, %cst_10 {dimension_numbers = #tpu.dot_dimension_numbers<[1], [0], [0], [1], [0, 0, 1, 1], [], []>} : vector<8x32xf32>, vector<32x128xf32>, vector<8x128xf32> -> vector<8x128xf32>
    %15 = arith.addf %13, %14 : vector<8x128xf32>
    %16 = arith.negf %15 : vector<8x128xf32>
    %17 = math.exp %16 : vector<8x128xf32>
    %cst_11 = arith.constant 1.000000e+00 : f32
    %18 = vector.broadcast %cst_11 : f32 to vector<8x128xf32>
    %19 = arith.addf %18, %17 : vector<8x128xf32>
    %20 = arith.divf %18, %19 : vector<8x128xf32>
    %21 = math.tanh %15 : vector<8x128xf32>
    %22 = vector.extract_strided_slice %20 {offsets = [0, 0], sizes = [8, 32], strides = [1, 1]} : vector<8x128xf32> to vector<8x32xf32>
    %23 = vector.extract_strided_slice %20 {offsets = [0, 32], sizes = [8, 32], strides = [1, 1]} : vector<8x128xf32> to vector<8x32xf32>
    %24 = vector.extract_strided_slice %21 {offsets = [0, 64], sizes = [8, 32], strides = [1, 1]} : vector<8x128xf32> to vector<8x32xf32>
    %25 = vector.extract_strided_slice %20 {offsets = [0, 96], sizes = [8, 32], strides = [1, 1]} : vector<8x128xf32> to vector<8x32xf32>
    %26 = arith.mulf %23, %11 : vector<8x32xf32>
    %27 = arith.mulf %22, %24 : vector<8x32xf32>
    %28 = arith.addf %26, %27 : vector<8x32xf32>
    %29 = math.tanh %28 : vector<8x32xf32>
    %30 = arith.mulf %25, %29 : vector<8x32xf32>
    %31 = vector.extract_strided_slice %9 {offsets = [1, 0, 0], sizes = [1, 8, 128], strides = [1, 1, 1]} : vector<8x8x128xf32> to vector<1x8x128xf32>
    %32 = vector.shape_cast %31 : vector<1x8x128xf32> to vector<8x128xf32>
    %cst_12 = arith.constant dense<0.000000e+00> : vector<8x128xf32>
    %33 = tpu.matmul %30, %1, %cst_12 {dimension_numbers = #tpu.dot_dimension_numbers<[1], [0], [0], [1], [0, 0, 1, 1], [], []>} : vector<8x32xf32>, vector<32x128xf32>, vector<8x128xf32> -> vector<8x128xf32>
    %34 = arith.addf %32, %33 : vector<8x128xf32>
    %35 = arith.negf %34 : vector<8x128xf32>
    %36 = math.exp %35 : vector<8x128xf32>
    %cst_13 = arith.constant 1.000000e+00 : f32
    %37 = vector.broadcast %cst_13 : f32 to vector<8x128xf32>
    %38 = arith.addf %37, %36 : vector<8x128xf32>
    %39 = arith.divf %37, %38 : vector<8x128xf32>
    %40 = math.tanh %34 : vector<8x128xf32>
    %41 = vector.extract_strided_slice %39 {offsets = [0, 0], sizes = [8, 32], strides = [1, 1]} : vector<8x128xf32> to vector<8x32xf32>
    %42 = vector.extract_strided_slice %39 {offsets = [0, 32], sizes = [8, 32], strides = [1, 1]} : vector<8x128xf32> to vector<8x32xf32>
    %43 = vector.extract_strided_slice %40 {offsets = [0, 64], sizes = [8, 32], strides = [1, 1]} : vector<8x128xf32> to vector<8x32xf32>
    %44 = vector.extract_strided_slice %39 {offsets = [0, 96], sizes = [8, 32], strides = [1, 1]} : vector<8x128xf32> to vector<8x32xf32>
    %45 = arith.mulf %42, %28 : vector<8x32xf32>
    %46 = arith.mulf %41, %43 : vector<8x32xf32>
    %47 = arith.addf %45, %46 : vector<8x32xf32>
    %48 = math.tanh %47 : vector<8x32xf32>
    %49 = arith.mulf %44, %48 : vector<8x32xf32>
    %50 = vector.extract_strided_slice %9 {offsets = [2, 0, 0], sizes = [1, 8, 128], strides = [1, 1, 1]} : vector<8x8x128xf32> to vector<1x8x128xf32>
    %51 = vector.shape_cast %50 : vector<1x8x128xf32> to vector<8x128xf32>
    %cst_14 = arith.constant dense<0.000000e+00> : vector<8x128xf32>
    %52 = tpu.matmul %49, %1, %cst_14 {dimension_numbers = #tpu.dot_dimension_numbers<[1], [0], [0], [1], [0, 0, 1, 1], [], []>} : vector<8x32xf32>, vector<32x128xf32>, vector<8x128xf32> -> vector<8x128xf32>
    %53 = arith.addf %51, %52 : vector<8x128xf32>
    %54 = arith.negf %53 : vector<8x128xf32>
    %55 = math.exp %54 : vector<8x128xf32>
    %cst_15 = arith.constant 1.000000e+00 : f32
    %56 = vector.broadcast %cst_15 : f32 to vector<8x128xf32>
    %57 = arith.addf %56, %55 : vector<8x128xf32>
    %58 = arith.divf %56, %57 : vector<8x128xf32>
    %59 = math.tanh %53 : vector<8x128xf32>
    %60 = vector.extract_strided_slice %58 {offsets = [0, 0], sizes = [8, 32], strides = [1, 1]} : vector<8x128xf32> to vector<8x32xf32>
    %61 = vector.extract_strided_slice %58 {offsets = [0, 32], sizes = [8, 32], strides = [1, 1]} : vector<8x128xf32> to vector<8x32xf32>
    %62 = vector.extract_strided_slice %59 {offsets = [0, 64], sizes = [8, 32], strides = [1, 1]} : vector<8x128xf32> to vector<8x32xf32>
    %63 = vector.extract_strided_slice %58 {offsets = [0, 96], sizes = [8, 32], strides = [1, 1]} : vector<8x128xf32> to vector<8x32xf32>
    %64 = arith.mulf %61, %47 : vector<8x32xf32>
    %65 = arith.mulf %60, %62 : vector<8x32xf32>
    %66 = arith.addf %64, %65 : vector<8x32xf32>
    %67 = math.tanh %66 : vector<8x32xf32>
    %68 = arith.mulf %63, %67 : vector<8x32xf32>
    %69 = vector.extract_strided_slice %9 {offsets = [3, 0, 0], sizes = [1, 8, 128], strides = [1, 1, 1]} : vector<8x8x128xf32> to vector<1x8x128xf32>
    %70 = vector.shape_cast %69 : vector<1x8x128xf32> to vector<8x128xf32>
    %cst_16 = arith.constant dense<0.000000e+00> : vector<8x128xf32>
    %71 = tpu.matmul %68, %1, %cst_16 {dimension_numbers = #tpu.dot_dimension_numbers<[1], [0], [0], [1], [0, 0, 1, 1], [], []>} : vector<8x32xf32>, vector<32x128xf32>, vector<8x128xf32> -> vector<8x128xf32>
    %72 = arith.addf %70, %71 : vector<8x128xf32>
    %73 = arith.negf %72 : vector<8x128xf32>
    %74 = math.exp %73 : vector<8x128xf32>
    %cst_17 = arith.constant 1.000000e+00 : f32
    %75 = vector.broadcast %cst_17 : f32 to vector<8x128xf32>
    %76 = arith.addf %75, %74 : vector<8x128xf32>
    %77 = arith.divf %75, %76 : vector<8x128xf32>
    %78 = math.tanh %72 : vector<8x128xf32>
    %79 = vector.extract_strided_slice %77 {offsets = [0, 0], sizes = [8, 32], strides = [1, 1]} : vector<8x128xf32> to vector<8x32xf32>
    %80 = vector.extract_strided_slice %77 {offsets = [0, 32], sizes = [8, 32], strides = [1, 1]} : vector<8x128xf32> to vector<8x32xf32>
    %81 = vector.extract_strided_slice %78 {offsets = [0, 64], sizes = [8, 32], strides = [1, 1]} : vector<8x128xf32> to vector<8x32xf32>
    %82 = vector.extract_strided_slice %77 {offsets = [0, 96], sizes = [8, 32], strides = [1, 1]} : vector<8x128xf32> to vector<8x32xf32>
    %83 = arith.mulf %80, %66 : vector<8x32xf32>
    %84 = arith.mulf %79, %81 : vector<8x32xf32>
    %85 = arith.addf %83, %84 : vector<8x32xf32>
    %86 = math.tanh %85 : vector<8x32xf32>
    %87 = arith.mulf %82, %86 : vector<8x32xf32>
    %88 = vector.extract_strided_slice %9 {offsets = [4, 0, 0], sizes = [1, 8, 128], strides = [1, 1, 1]} : vector<8x8x128xf32> to vector<1x8x128xf32>
    %89 = vector.shape_cast %88 : vector<1x8x128xf32> to vector<8x128xf32>
    %cst_18 = arith.constant dense<0.000000e+00> : vector<8x128xf32>
    %90 = tpu.matmul %87, %1, %cst_18 {dimension_numbers = #tpu.dot_dimension_numbers<[1], [0], [0], [1], [0, 0, 1, 1], [], []>} : vector<8x32xf32>, vector<32x128xf32>, vector<8x128xf32> -> vector<8x128xf32>
    %91 = arith.addf %89, %90 : vector<8x128xf32>
    %92 = arith.negf %91 : vector<8x128xf32>
    %93 = math.exp %92 : vector<8x128xf32>
    %cst_19 = arith.constant 1.000000e+00 : f32
    %94 = vector.broadcast %cst_19 : f32 to vector<8x128xf32>
    %95 = arith.addf %94, %93 : vector<8x128xf32>
    %96 = arith.divf %94, %95 : vector<8x128xf32>
    %97 = math.tanh %91 : vector<8x128xf32>
    %98 = vector.extract_strided_slice %96 {offsets = [0, 0], sizes = [8, 32], strides = [1, 1]} : vector<8x128xf32> to vector<8x32xf32>
    %99 = vector.extract_strided_slice %96 {offsets = [0, 32], sizes = [8, 32], strides = [1, 1]} : vector<8x128xf32> to vector<8x32xf32>
    %100 = vector.extract_strided_slice %97 {offsets = [0, 64], sizes = [8, 32], strides = [1, 1]} : vector<8x128xf32> to vector<8x32xf32>
    %101 = vector.extract_strided_slice %96 {offsets = [0, 96], sizes = [8, 32], strides = [1, 1]} : vector<8x128xf32> to vector<8x32xf32>
    %102 = arith.mulf %99, %85 : vector<8x32xf32>
    %103 = arith.mulf %98, %100 : vector<8x32xf32>
    %104 = arith.addf %102, %103 : vector<8x32xf32>
    %105 = math.tanh %104 : vector<8x32xf32>
    %106 = arith.mulf %101, %105 : vector<8x32xf32>
    %107 = vector.extract_strided_slice %9 {offsets = [5, 0, 0], sizes = [1, 8, 128], strides = [1, 1, 1]} : vector<8x8x128xf32> to vector<1x8x128xf32>
    %108 = vector.shape_cast %107 : vector<1x8x128xf32> to vector<8x128xf32>
    %cst_20 = arith.constant dense<0.000000e+00> : vector<8x128xf32>
    %109 = tpu.matmul %106, %1, %cst_20 {dimension_numbers = #tpu.dot_dimension_numbers<[1], [0], [0], [1], [0, 0, 1, 1], [], []>} : vector<8x32xf32>, vector<32x128xf32>, vector<8x128xf32> -> vector<8x128xf32>
    %110 = arith.addf %108, %109 : vector<8x128xf32>
    %111 = arith.negf %110 : vector<8x128xf32>
    %112 = math.exp %111 : vector<8x128xf32>
    %cst_21 = arith.constant 1.000000e+00 : f32
    %113 = vector.broadcast %cst_21 : f32 to vector<8x128xf32>
    %114 = arith.addf %113, %112 : vector<8x128xf32>
    %115 = arith.divf %113, %114 : vector<8x128xf32>
    %116 = math.tanh %110 : vector<8x128xf32>
    %117 = vector.extract_strided_slice %115 {offsets = [0, 0], sizes = [8, 32], strides = [1, 1]} : vector<8x128xf32> to vector<8x32xf32>
    %118 = vector.extract_strided_slice %115 {offsets = [0, 32], sizes = [8, 32], strides = [1, 1]} : vector<8x128xf32> to vector<8x32xf32>
    %119 = vector.extract_strided_slice %116 {offsets = [0, 64], sizes = [8, 32], strides = [1, 1]} : vector<8x128xf32> to vector<8x32xf32>
    %120 = vector.extract_strided_slice %115 {offsets = [0, 96], sizes = [8, 32], strides = [1, 1]} : vector<8x128xf32> to vector<8x32xf32>
    %121 = arith.mulf %118, %104 : vector<8x32xf32>
    %122 = arith.mulf %117, %119 : vector<8x32xf32>
    %123 = arith.addf %121, %122 : vector<8x32xf32>
    %124 = math.tanh %123 : vector<8x32xf32>
    %125 = arith.mulf %120, %124 : vector<8x32xf32>
    %126 = vector.extract_strided_slice %9 {offsets = [6, 0, 0], sizes = [1, 8, 128], strides = [1, 1, 1]} : vector<8x8x128xf32> to vector<1x8x128xf32>
    %127 = vector.shape_cast %126 : vector<1x8x128xf32> to vector<8x128xf32>
    %cst_22 = arith.constant dense<0.000000e+00> : vector<8x128xf32>
    %128 = tpu.matmul %125, %1, %cst_22 {dimension_numbers = #tpu.dot_dimension_numbers<[1], [0], [0], [1], [0, 0, 1, 1], [], []>} : vector<8x32xf32>, vector<32x128xf32>, vector<8x128xf32> -> vector<8x128xf32>
    %129 = arith.addf %127, %128 : vector<8x128xf32>
    %130 = arith.negf %129 : vector<8x128xf32>
    %131 = math.exp %130 : vector<8x128xf32>
    %cst_23 = arith.constant 1.000000e+00 : f32
    %132 = vector.broadcast %cst_23 : f32 to vector<8x128xf32>
    %133 = arith.addf %132, %131 : vector<8x128xf32>
    %134 = arith.divf %132, %133 : vector<8x128xf32>
    %135 = math.tanh %129 : vector<8x128xf32>
    %136 = vector.extract_strided_slice %134 {offsets = [0, 0], sizes = [8, 32], strides = [1, 1]} : vector<8x128xf32> to vector<8x32xf32>
    %137 = vector.extract_strided_slice %134 {offsets = [0, 32], sizes = [8, 32], strides = [1, 1]} : vector<8x128xf32> to vector<8x32xf32>
    %138 = vector.extract_strided_slice %135 {offsets = [0, 64], sizes = [8, 32], strides = [1, 1]} : vector<8x128xf32> to vector<8x32xf32>
    %139 = vector.extract_strided_slice %134 {offsets = [0, 96], sizes = [8, 32], strides = [1, 1]} : vector<8x128xf32> to vector<8x32xf32>
    %140 = arith.mulf %137, %123 : vector<8x32xf32>
    %141 = arith.mulf %136, %138 : vector<8x32xf32>
    %142 = arith.addf %140, %141 : vector<8x32xf32>
    %143 = math.tanh %142 : vector<8x32xf32>
    %144 = arith.mulf %139, %143 : vector<8x32xf32>
    %145 = vector.extract_strided_slice %9 {offsets = [7, 0, 0], sizes = [1, 8, 128], strides = [1, 1, 1]} : vector<8x8x128xf32> to vector<1x8x128xf32>
    %146 = vector.shape_cast %145 : vector<1x8x128xf32> to vector<8x128xf32>
    %cst_24 = arith.constant dense<0.000000e+00> : vector<8x128xf32>
    %147 = tpu.matmul %144, %1, %cst_24 {dimension_numbers = #tpu.dot_dimension_numbers<[1], [0], [0], [1], [0, 0, 1, 1], [], []>} : vector<8x32xf32>, vector<32x128xf32>, vector<8x128xf32> -> vector<8x128xf32>
    %148 = arith.addf %146, %147 : vector<8x128xf32>
    %149 = arith.negf %148 : vector<8x128xf32>
    %150 = math.exp %149 : vector<8x128xf32>
    %cst_25 = arith.constant 1.000000e+00 : f32
    %151 = vector.broadcast %cst_25 : f32 to vector<8x128xf32>
    %152 = arith.addf %151, %150 : vector<8x128xf32>
    %153 = arith.divf %151, %152 : vector<8x128xf32>
    %154 = math.tanh %148 : vector<8x128xf32>
    %155 = vector.extract_strided_slice %153 {offsets = [0, 0], sizes = [8, 32], strides = [1, 1]} : vector<8x128xf32> to vector<8x32xf32>
    %156 = vector.extract_strided_slice %153 {offsets = [0, 32], sizes = [8, 32], strides = [1, 1]} : vector<8x128xf32> to vector<8x32xf32>
    %157 = vector.extract_strided_slice %154 {offsets = [0, 64], sizes = [8, 32], strides = [1, 1]} : vector<8x128xf32> to vector<8x32xf32>
    %158 = vector.extract_strided_slice %153 {offsets = [0, 96], sizes = [8, 32], strides = [1, 1]} : vector<8x128xf32> to vector<8x32xf32>
    %159 = arith.mulf %156, %142 : vector<8x32xf32>
    %160 = arith.mulf %155, %157 : vector<8x32xf32>
    %161 = arith.addf %159, %160 : vector<8x32xf32>
    %162 = math.tanh %161 : vector<8x32xf32>
    %163 = arith.mulf %158, %162 : vector<8x32xf32>
    %c0_26 = arith.constant 0 : index
    %c0_27 = arith.constant 0 : index
    %164 = vector.load %arg4[%c0_26, %c0_27] : memref<8x32xf32, #tpu.memory_space<vmem>>, vector<8x32xf32>
    tpu.vector_store %arg4[%c0_26, %c0_27], %163 {strides = array<i32>} : memref<8x32xf32, #tpu.memory_space<vmem>>, vector<8x32xf32>,
    return
  }
}

</mosaic_0001>

<llo_original>
// kernel: tpu_custom_call.1
$region0: #{tpu_custom_call.1}
  #allocation0 [shape = 'u32[]', space=smem, size = 0x4, offset = 0x4, fixed_abs, tag = 'smem constant byte address 0x4 - core index']
  #allocation1 [shape = 'u32[144,128]{1,0:T(1,128)}', space=vmem, size = 0x12000, scoped, tag = 'internal scratch']
  %s0 = inlined_call_operand.hbm [shape: f32[8,8,16], index: 0, kind: input, shape index: {}]
  %s1 = inlined_call_operand.hbm [shape: f32[16,128], index: 1, kind: input, shape index: {}]
  %s2 = inlined_call_operand.hbm [shape: f32[32,128], index: 2, kind: input, shape index: {}]
  %s3 = inlined_call_operand.hbm [shape: f32[8,128], index: 3, kind: input, shape index: {}]
  %s4 = inlined_call_operand.hbm [shape: f32[8,32], index: 4, kind: output, shape index: {}]
  %s5 = sld [smem:[#allocation0]]
  $region42: #{tpu_custom_call.1} parent=0
    _
  %s7 = ssub.s32 1, %s5
  %s8 = scalar_select 0, %s7, %s5
  $region1: #{tpu_custom_call.1} parent=0
    #allocation2 [shape = 'u8[32768]{0}', space=vmem, size = 0x8000, scoped, tag = 'input window, operand 0, single buffered']
    #allocation3 [shape = 's32[1]{0}', space=sflag, size = 0x4, scoped, tag = 'scoped memory for tpu_custom_call.1']
    #allocation4 [shape = 's32[1]{0}', space=sflag, size = 0x4, scoped, tag = 'scoped memory for tpu_custom_call.1']
    #allocation5 [shape = 'u8[8192]{0}', space=vmem, size = 0x2000, scoped, tag = 'input window, operand 1, single buffered']
    #allocation6 [shape = 's32[1]{0}', space=sflag, size = 0x4, scoped, tag = 'scoped memory for tpu_custom_call.1']
    #allocation7 [shape = 'u8[16384]{0}', space=vmem, size = 0x4000, scoped, tag = 'input window, operand 2, single buffered']
    #allocation8 [shape = 'u8[4096]{0}', space=vmem, size = 0x1000, scoped, tag = 'input window, operand 3, single buffered']
    #allocation9 [shape = 's32[1]{0}', space=sflag, size = 0x4, scoped, tag = 'scoped memory for tpu_custom_call.1']
    #allocation10 [shape = 'u8[4096]{0}', space=vmem, size = 0x1000, scoped, tag = 'output window, operand 0, single buffered']
    %9 = vsyncpa [#allocation3], 0
    %10 = vsyncpa [#allocation6], 0
    %11 = vsyncpa [#allocation9], 0
    %12 = vsyncpa [#allocation4], 0
    // Predicated region
    $region2: #{tpu_custom_call.1} parent=1 // pred_check
      _
    $region3: #{tpu_custom_call.1} parent=1 // pred_check_branch
      %14 = sbr.rel (0) target = $region5
    $region4: #{tpu_custom_call.1} parent=1 // pred_region
      %s16 = ssub.s32 1024, 1024
      %17 = vsyncadd [#allocation3], %s16
      %s18 = sshll.u32 [#allocation2], 4
      %s19 = int_to_ptr.vmem [resolvable:$true] %s18
      %24 = dma.hbm_to_vmem [thread:$0]  %s0, 1024, %s19, [#allocation3], 128, 128, 8
    $region5: #{tpu_custom_call.1} parent=1 // pred_fallthru
      _
    // Predicated region
    $region6: #{tpu_custom_call.1} parent=1 // pred_check
      _
    $region7: #{tpu_custom_call.1} parent=1 // pred_check_branch
      %26 = sbr.rel (0) target = $region9
    $region8: #{tpu_custom_call.1} parent=1 // pred_region
      %s28 = ssub.s32 256, 256
      %29 = vsyncadd [#allocation6], %s28
      %s30 = sshll.u32 [#allocation5], 4
      %s31 = int_to_ptr.vmem [resolvable:$true] %s30
      %36 = dma.hbm_to_vmem [thread:$0]  %s1, 256, %s31, [#allocation6], 128, 128, 8
    $region9: #{tpu_custom_call.1} parent=1 // pred_fallthru
      _
    // Predicated region
    $region10: #{tpu_custom_call.1} parent=1 // pred_check
      _
    $region11: #{tpu_custom_call.1} parent=1 // pred_check_branch
      %38 = sbr.rel (0) target = $region13
    $region12: #{tpu_custom_call.1} parent=1 // pred_region
      %s40 = ssub.s32 512, 512
      %41 = vsyncadd [#allocation6], %s40
      %s42 = sshll.u32 [#allocation7], 4
      %s43 = int_to_ptr.vmem [resolvable:$true] %s42
      %48 = dma.hbm_to_vmem [thread:$0]  %s2, 512, %s43, [#allocation6], 128, 128, 8
    $region13: #{tpu_custom_call.1} parent=1 // pred_fallthru
      _
    // Predicated region
    $region14: #{tpu_custom_call.1} parent=1 // pred_check
      _
    $region15: #{tpu_custom_call.1} parent=1 // pred_check_branch
      %50 = sbr.rel (0) target = $region17
    $region16: #{tpu_custom_call.1} parent=1 // pred_region
      %s52 = ssub.s32 128, 128
      %53 = vsyncadd [#allocation9], %s52
      %s55 = sshll.u32 [#allocation8], 4
      %s56 = int_to_ptr.vmem [resolvable:$true] %s55
      %58 = dma.hbm_to_vmem [thread:$0]  %s3, 128, %s56, [#allocation9]
    $region17: #{tpu_custom_call.1} parent=1 // pred_fallthru
      _
    // Predicated region
    $region18: #{tpu_custom_call.1} parent=1 // pred_check
      _
    $region19: #{tpu_custom_call.1} parent=1 // pred_check_branch
      %60 = sbr.rel (0) target = $region21
    $region20: #{tpu_custom_call.1} parent=1 // pred_region
      %61 = dma.done [#allocation3], 1024
    $region21: #{tpu_custom_call.1} parent=1 // pred_fallthru
      _
    // Predicated region
    $region22: #{tpu_custom_call.1} parent=1 // pred_check
      _
    $region23: #{tpu_custom_call.1} parent=1 // pred_check_branch
      %63 = sbr.rel (0) target = $region25
    $region24: #{tpu_custom_call.1} parent=1 // pred_region
      %64 = dma.done [#allocation6], 256
    $region25: #{tpu_custom_call.1} parent=1 // pred_fallthru
      _
    // Predicated region
    $region26: #{tpu_custom_call.1} parent=1 // pred_check
      _
    $region27: #{tpu_custom_call.1} parent=1 // pred_check_branch
      %66 = sbr.rel (0) target = $region29
    $region28: #{tpu_custom_call.1} parent=1 // pred_region
      %67 = dma.done [#allocation6], 512
    $region29: #{tpu_custom_call.1} parent=1 // pred_fallthru
      _
    // Predicated region
    $region30: #{tpu_custom_call.1} parent=1 // pred_check
      _
    $region31: #{tpu_custom_call.1} parent=1 // pred_check_branch
      %69 = sbr.rel (0) target = $region33
    $region32: #{tpu_custom_call.1} parent=1 // pred_region
      %70 = dma.done [#allocation9], 128
    $region33: #{tpu_custom_call.1} parent=1 // pred_fallthru
      _
    %v71 = vld [vmem:[#allocation5] sm:$0xff]
    %v72 = vld [vmem:[#allocation5 + $0x8] sm:$0xff]
    %v73 = vld [vmem:[#allocation7] sm:$0xff]
    %v74 = vld [vmem:[#allocation7 + $0x8] sm:$0xff]
    %v75 = vld [vmem:[#allocation7 + $0x10] sm:$0xff]
    %v76 = vld [vmem:[#allocation7 + $0x18] sm:$0xff]
    %v77 = vld [vmem:[#allocation8] sm:$0xff]
    %v78 = vld [vmem:[#allocation2] sm:$0xff]
    %v79 = vld [vmem:[#allocation2 + $0x8] sm:$0xff]
    %v80 = vld [vmem:[#allocation2 + $0x10] sm:$0xff]
    %v81 = vld [vmem:[#allocation2 + $0x18] sm:$0xff]
    %v82 = vld [vmem:[#allocation2 + $0x20] sm:$0xff]
    %v83 = vld [vmem:[#allocation2 + $0x28] sm:$0xff]
    %v84 = vld [vmem:[#allocation2 + $0x30] sm:$0xff]
    %v85 = vld [vmem:[#allocation2 + $0x38] sm:$0xff]
    %vm86 = vcmask 130048
    %v88 = vsel %vm86, %v78, 0
    %v91 = vsel %vm86, %v79, 0
    %v94 = vsel %vm86, %v80, 0
    %v97 = vsel %vm86, %v81, 0
    %v100 = vsel %vm86, %v82, 0
    %v103 = vsel %vm86, %v83, 0
    %v106 = vsel %vm86, %v84, 0
    %v109 = vsel %vm86, %v85, 0
    %111 = vmatprep.subr.mxu0 0.0
    %112 = vmatpush1.msra.mxu0 0.0
    %113 = vmatprep.subr.mxu0 0.0
    %114 = vmatpush1.msra.mxu0 0.0
    %115 = vmatprep.subr.mxu0 0.0
    %116 = vmatpush1.msra.mxu0 0.0
    %117 = vmatprep.subr.mxu0 0.0
    %118 = vmatpush1.msra.mxu0 0.0
    %119 = vmatprep.subr.mxu0 0.0
    %120 = vmatpush1.msra.mxu0 0.0
    %121 = vmatprep.subr.mxu0 0.0
    %122 = vmatpush1.msra.mxu0 0.0
    %123 = vmatprep.subr.mxu0 0.0
    %124 = vmatpush1.msra.mxu0 0.0
    %125 = vmatprep.subr.mxu0 0.0
    %126 = vmatpush1.msra.mxu0 0.0
    %127 = vmatprep.subr.mxu0 0.0
    %128 = vmatpush1.msra.mxu0 0.0
    %129 = vmatprep.subr.mxu0 0.0
    %130 = vmatpush1.msra.mxu0 0.0
    %131 = vmatprep.subr.mxu0 0.0
    %132 = vmatpush1.msra.mxu0 0.0
    %133 = vmatprep.subr.mxu0 0.0
    %134 = vmatpush1.msra.mxu0 0.0
    %135 = vmatprep.subr.mxu0 0.0
    %136 = vmatpush1.msra.mxu0 0.0
    %137 = vmatprep.subr.mxu0 0.0
    %138 = vmatpush1.msra.mxu0 0.0
    %139 = vmatprep.subr.mxu0 0.0
    %140 = vmatpush1.msra.mxu0 %v72
    %141 = vmatprep.subr.mxu0 0.0
    %142 = vmatpush1.msra.mxu0 %v71
    %143 = vmatprep.subr.mxu0 0.0
    %144 = vmatpush2.msra.mxu0 0.0
    %145 = vmatprep.subr.mxu0 0.0
    %146 = vmatpush2.msra.mxu0 0.0
    %147 = vmatprep.subr.mxu0 0.0
    %148 = vmatpush2.msra.mxu0 0.0
    %149 = vmatprep.subr.mxu0 0.0
    %150 = vmatpush2.msra.mxu0 0.0
    %151 = vmatprep.subr.mxu0 0.0
    %152 = vmatpush2.msra.mxu0 0.0
    %153 = vmatprep.subr.mxu0 0.0
    %154 = vmatpush2.msra.mxu0 0.0
    %155 = vmatprep.subr.mxu0 0.0
    %156 = vmatpush2.msra.mxu0 0.0
    %157 = vmatprep.subr.mxu0 0.0
    %158 = vmatpush2.msra.mxu0 0.0
    %159 = vmatprep.subr.mxu0 0.0
    %160 = vmatpush2.msra.mxu0 0.0
    %161 = vmatprep.subr.mxu0 0.0
    %162 = vmatpush2.msra.mxu0 0.0
    %163 = vmatprep.subr.mxu0 0.0
    %164 = vmatpush2.msra.mxu0 0.0
    %165 = vmatprep.subr.mxu0 0.0
    %166 = vmatpush2.msra.mxu0 0.0
    %167 = vmatprep.subr.mxu0 0.0
    %168 = vmatpush2.msra.mxu0 0.0
    %169 = vmatprep.subr.mxu0 0.0
    %170 = vmatpush2.msra.mxu0 0.0
    %171 = vmatprep.subr.mxu0 0.0
    %172 = vmatpush2.msra.mxu0 0.0
    %173 = vmatprep.subr.mxu0 0.0
    %174 = vmatpush2.msra.mxu0 0.0
    %175 = vmatprep.mubr.f32.mxu0 0.0
    %176 = vmatmul.mubr.f32.gmra.mxu0 %v88
    %v177 = vpop.f32.mrf.mxu0
    %v178 = vadd.f32 0.0, %v177
    %v179 = vpop.f32.mrf.mxu0
    %180 = vmatprep.mubr.f32.mxu0 0.0
    %181 = vmatmul.mubr.f32.gmra.mxu0 %v91
    %v182 = vpop.f32.mrf.mxu0
    %v183 = vadd.f32 0.0, %v182
    %v184 = vpop.f32.mrf.mxu0
    %185 = vmatprep.mubr.f32.mxu0 0.0
    %186 = vmatmul.mubr.f32.gmra.mxu0 %v94
    %v187 = vpop.f32.mrf.mxu0
    %v188 = vadd.f32 0.0, %v187
    %v189 = vpop.f32.mrf.mxu0
    %190 = vmatprep.mubr.f32.mxu0 0.0
    %191 = vmatmul.mubr.f32.gmra.mxu0 %v97
    %v192 = vpop.f32.mrf.mxu0
    %v193 = vadd.f32 0.0, %v192
    %v194 = vpop.f32.mrf.mxu0
    %195 = vmatprep.mubr.f32.mxu0 0.0
    %196 = vmatmul.mubr.f32.gmra.mxu0 %v100
    %v197 = vpop.f32.mrf.mxu0
    %v198 = vadd.f32 0.0, %v197
    %v199 = vpop.f32.mrf.mxu0
    %200 = vmatprep.mubr.f32.mxu0 0.0
    %201 = vmatmul.mubr.f32.gmra.mxu0 %v103
    %v202 = vpop.f32.mrf.mxu0
    %v203 = vadd.f32 0.0, %v202
    %v204 = vpop.f32.mrf.mxu0
    %205 = vmatprep.mubr.f32.mxu0 0.0
    %206 = vmatmul.mubr.f32.gmra.mxu0 %v106
    %v207 = vpop.f32.mrf.mxu0
    %v208 = vadd.f32 0.0, %v207
    %v209 = vpop.f32.mrf.mxu0
    %210 = vmatprep.mubr.f32.mxu0 0.0
    %211 = vmatmul.mubr.f32.gmra.mxu0 %v109
    %v212 = vpop.f32.mrf.mxu0
    %v213 = vadd.f32 0.0, %v212
    %v214 = vpop.f32.mrf.mxu0
    %215 = vdwg.mxu0
    %v216 = vadd.f32 %v178, %v77
    %v217 = vadd.f32 %v183, %v77
    %v218 = vadd.f32 %v188, %v77
    %v219 = vadd.f32 %v193, %v77
    %v220 = vadd.f32 %v198, %v77
    %v221 = vadd.f32 %v203, %v77
    %v222 = vadd.f32 %v208, %v77
    %v223 = vadd.f32 %v213, %v77
    %vm224 = vcmask 261120
    %v226 = vsel %vm224, 0.0, 0
    %228 = vmatprep.subr.mxu0 0.0
    %229 = vmatpush1.msra.mxu0 0.0
    %230 = vmatprep.subr.mxu0 0.0
    %231 = vmatpush1.msra.mxu0 0.0
    %232 = vmatprep.subr.mxu0 0.0
    %233 = vmatpush1.msra.mxu0 0.0
    %234 = vmatprep.subr.mxu0 0.0
    %235 = vmatpush1.msra.mxu0 0.0
    %236 = vmatprep.subr.mxu0 0.0
    %237 = vmatpush1.msra.mxu0 0.0
    %238 = vmatprep.subr.mxu0 0.0
    %239 = vmatpush1.msra.mxu0 0.0
    %240 = vmatprep.subr.mxu0 0.0
    %241 = vmatpush1.msra.mxu0 0.0
    %242 = vmatprep.subr.mxu0 0.0
    %243 = vmatpush1.msra.mxu0 0.0
    %244 = vmatprep.subr.mxu0 0.0
    %245 = vmatpush1.msra.mxu0 0.0
    %246 = vmatprep.subr.mxu0 0.0
    %247 = vmatpush1.msra.mxu0 0.0
    %248 = vmatprep.subr.mxu0 0.0
    %249 = vmatpush1.msra.mxu0 0.0
    %250 = vmatprep.subr.mxu0 0.0
    %251 = vmatpush1.msra.mxu0 0.0
    %252 = vmatprep.subr.mxu0 0.0
    %253 = vmatpush1.msra.mxu0 %v76
    %254 = vmatprep.subr.mxu0 0.0
    %255 = vmatpush1.msra.mxu0 %v75
    %256 = vmatprep.subr.mxu0 0.0
    %257 = vmatpush1.msra.mxu0 %v74
    %258 = vmatprep.subr.mxu0 0.0
    %259 = vmatpush1.msra.mxu0 %v73
    %260 = vmatprep.subr.mxu0 0.0
    %261 = vmatpush2.msra.mxu0 0.0
    %262 = vmatprep.subr.mxu0 0.0
    %263 = vmatpush2.msra.mxu0 0.0
    %264 = vmatprep.subr.mxu0 0.0
    %265 = vmatpush2.msra.mxu0 0.0
    %266 = vmatprep.subr.mxu0 0.0
    %267 = vmatpush2.msra.mxu0 0.0
    %268 = vmatprep.subr.mxu0 0.0
    %269 = vmatpush2.msra.mxu0 0.0
    %270 = vmatprep.subr.mxu0 0.0
    %271 = vmatpush2.msra.mxu0 0.0
    %272 = vmatprep.subr.mxu0 0.0
    %273 = vmatpush2.msra.mxu0 0.0
    %274 = vmatprep.subr.mxu0 0.0
    %275 = vmatpush2.msra.mxu0 0.0
    %276 = vmatprep.subr.mxu0 0.0
    %277 = vmatpush2.msra.mxu0 0.0
    %278 = vmatprep.subr.mxu0 0.0
    %279 = vmatpush2.msra.mxu0 0.0
    %280 = vmatprep.subr.mxu0 0.0
    %281 = vmatpush2.msra.mxu0 0.0
    %282 = vmatprep.subr.mxu0 0.0
    %283 = vmatpush2.msra.mxu0 0.0
    %284 = vmatprep.subr.mxu0 0.0
    %285 = vmatpush2.msra.mxu0 0.0
    %286 = vmatprep.subr.mxu0 0.0
    %287 = vmatpush2.msra.mxu0 0.0
    %288 = vmatprep.subr.mxu0 0.0
    %289 = vmatpush2.msra.mxu0 0.0
    %290 = vmatprep.subr.mxu0 0.0
    %291 = vmatpush2.msra.mxu0 0.0
    %292 = vmatprep.mubr.f32.mxu0 0.0
    %293 = vmatmul.mubr.f32.gmra.mxu0 %v226
    %v294 = vpop.f32.mrf.mxu0
    %v295 = vadd.f32 0.0, %v294
    %v296 = vpop.f32.mrf.mxu0
    %297 = vdwg.mxu0
    %v298 = vadd.f32 %v216, %v295
    %v299 = vxor.u32 %v298, 2147483648
    %v300 = vmul.f32 %v299, 1.442695
    %v301 = vpow.pop %v300
    %v302 = vadd.f32 %v301, 1.0
    %v303 = vrcp.pop %v302
    %v304 = vmul.f32 1.0, %v303
    %v305 = vtanh.pop %v298
    %v306 = vmul.f32 %v304, 0.0
    %308 = vrot.lane.b32.xlu0 %v305, 64
    %v309 = vpop.permute.xlu0 %308
    %v311 = vmul.f32 %v304, %v309
    %313 = vrot.lane.b32.xlu0 %v311, 32
    %v314 = vpop.permute.xlu0 %313
    %v316 = vadd.f32 %v306, %v314
    %v317 = vtanh.pop %v316
    %319 = vrot.lane.b32.xlu0 %v317, 64
    %v320 = vpop.permute.xlu0 %319
    %v322 = vmul.f32 %v304, %v320
    %324 = vrot.lane.b32.xlu0 %v322, 32
    %v325 = vpop.permute.xlu0 %324
    %v326 = vsel %vm224, %v325, 0
    %328 = vmatprep.subr.mxu0 0.0
    %329 = vmatpush1.msra.mxu0 0.0
    %330 = vmatprep.subr.mxu0 0.0
    %331 = vmatpush1.msra.mxu0 0.0
    %332 = vmatprep.subr.mxu0 0.0
    %333 = vmatpush1.msra.mxu0 0.0
    %334 = vmatprep.subr.mxu0 0.0
    %335 = vmatpush1.msra.mxu0 0.0
    %336 = vmatprep.subr.mxu0 0.0
    %337 = vmatpush1.msra.mxu0 0.0
    %338 = vmatprep.subr.mxu0 0.0
    %339 = vmatpush1.msra.mxu0 0.0
    %340 = vmatprep.subr.mxu0 0.0
    %341 = vmatpush1.msra.mxu0 0.0
    %342 = vmatprep.subr.mxu0 0.0
    %343 = vmatpush1.msra.mxu0 0.0
    %344 = vmatprep.subr.mxu0 0.0
    %345 = vmatpush1.msra.mxu0 0.0
    %346 = vmatprep.subr.mxu0 0.0
    %347 = vmatpush1.msra.mxu0 0.0
    %348 = vmatprep.subr.mxu0 0.0
    %349 = vmatpush1.msra.mxu0 0.0
    %350 = vmatprep.subr.mxu0 0.0
    %351 = vmatpush1.msra.mxu0 0.0
    %352 = vmatprep.subr.mxu0 0.0
    %353 = vmatpush1.msra.mxu0 %v76
    %354 = vmatprep.subr.mxu0 0.0
    %355 = vmatpush1.msra.mxu0 %v75
    %356 = vmatprep.subr.mxu0 0.0
    %357 = vmatpush1.msra.mxu0 %v74
    %358 = vmatprep.subr.mxu0 0.0
    %359 = vmatpush1.msra.mxu0 %v73
    %360 = vmatprep.subr.mxu0 0.0
    %361 = vmatpush2.msra.mxu0 0.0
    %362 = vmatprep.subr.mxu0 0.0
    %363 = vmatpush2.msra.mxu0 0.0
    %364 = vmatprep.subr.mxu0 0.0
    %365 = vmatpush2.msra.mxu0 0.0
    %366 = vmatprep.subr.mxu0 0.0
    %367 = vmatpush2.msra.mxu0 0.0
    %368 = vmatprep.subr.mxu0 0.0
    %369 = vmatpush2.msra.mxu0 0.0
    %370 = vmatprep.subr.mxu0 0.0
    %371 = vmatpush2.msra.mxu0 0.0
    %372 = vmatprep.subr.mxu0 0.0
    %373 = vmatpush2.msra.mxu0 0.0
    %374 = vmatprep.subr.mxu0 0.0
    %375 = vmatpush2.msra.mxu0 0.0
    %376 = vmatprep.subr.mxu0 0.0
    %377 = vmatpush2.msra.mxu0 0.0
    %378 = vmatprep.subr.mxu0 0.0
    %379 = vmatpush2.msra.mxu0 0.0
    %380 = vmatprep.subr.mxu0 0.0
    %381 = vmatpush2.msra.mxu0 0.0
    %382 = vmatprep.subr.mxu0 0.0
    %383 = vmatpush2.msra.mxu0 0.0
    %384 = vmatprep.subr.mxu0 0.0
    %385 = vmatpush2.msra.mxu0 0.0
    %386 = vmatprep.subr.mxu0 0.0
    %387 = vmatpush2.msra.mxu0 0.0
    %388 = vmatprep.subr.mxu0 0.0
    %389 = vmatpush2.msra.mxu0 0.0
    %390 = vmatprep.subr.mxu0 0.0
    %391 = vmatpush2.msra.mxu0 0.0
    %392 = vmatprep.mubr.f32.mxu0 0.0
    %393 = vmatmul.mubr.f32.gmra.mxu0 %v326
    %v394 = vpop.f32.mrf.mxu0
    %v395 = vadd.f32 0.0, %v394
    %v396 = vpop.f32.mrf.mxu0
    %397 = vdwg.mxu0
    %v398 = vadd.f32 %v217, %v395
    %v399 = vxor.u32 %v398, 2147483648
    %v400 = vmul.f32 %v399, 1.442695
    %v401 = vpow.pop %v400
    %v402 = vadd.f32 %v401, 1.0
    %v403 = vrcp.pop %v402
    %v404 = vmul.f32 1.0, %v403
    %v405 = vtanh.pop %v398
    %v406 = vmul.f32 %v404, %v316
    %408 = vrot.lane.b32.xlu0 %v405, 64
    %v409 = vpop.permute.xlu0 %408
    %v411 = vmul.f32 %v404, %v409
    %413 = vrot.lane.b32.xlu0 %v411, 32
    %v414 = vpop.permute.xlu0 %413
    %v416 = vadd.f32 %v406, %v414
    %v417 = vtanh.pop %v416
    %419 = vrot.lane.b32.xlu0 %v417, 64
    %v420 = vpop.permute.xlu0 %419
    %v422 = vmul.f32 %v404, %v420
    %424 = vrot.lane.b32.xlu0 %v422, 32
    %v425 = vpop.permute.xlu0 %424
    %v426 = vsel %vm224, %v425, 0
    %428 = vmatprep.subr.mxu0 0.0
    %429 = vmatpush1.msra.mxu0 0.0
    %430 = vmatprep.subr.mxu0 0.0
    %431 = vmatpush1.msra.mxu0 0.0
    %432 = vmatprep.subr.mxu0 0.0
    %433 = vmatpush1.msra.mxu0 0.0
    %434 = vmatprep.subr.mxu0 0.0
    %435 = vmatpush1.msra.mxu0 0.0
    %436 = vmatprep.subr.mxu0 0.0
    %437 = vmatpush1.msra.mxu0 0.0
    %438 = vmatprep.subr.mxu0 0.0
    %439 = vmatpush1.msra.mxu0 0.0
    %440 = vmatprep.subr.mxu0 0.0
    %441 = vmatpush1.msra.mxu0 0.0
    %442 = vmatprep.subr.mxu0 0.0
    %443 = vmatpush1.msra.mxu0 0.0
    %444 = vmatprep.subr.mxu0 0.0
    %445 = vmatpush1.msra.mxu0 0.0
    %446 = vmatprep.subr.mxu0 0.0
    %447 = vmatpush1.msra.mxu0 0.0
    %448 = vmatprep.subr.mxu0 0.0
    %449 = vmatpush1.msra.mxu0 0.0
    %450 = vmatprep.subr.mxu0 0.0
    %451 = vmatpush1.msra.mxu0 0.0
    %452 = vmatprep.subr.mxu0 0.0
    %453 = vmatpush1.msra.mxu0 %v76
    %454 = vmatprep.subr.mxu0 0.0
    %455 = vmatpush1.msra.mxu0 %v75
    %456 = vmatprep.subr.mxu0 0.0
    %457 = vmatpush1.msra.mxu0 %v74
    %458 = vmatprep.subr.mxu0 0.0
    %459 = vmatpush1.msra.mxu0 %v73
    %460 = vmatprep.subr.mxu0 0.0
    %461 = vmatpush2.msra.mxu0 0.0
    %462 = vmatprep.subr.mxu0 0.0
    %463 = vmatpush2.msra.mxu0 0.0
    %464 = vmatprep.subr.mxu0 0.0
    %465 = vmatpush2.msra.mxu0 0.0
    %466 = vmatprep.subr.mxu0 0.0
    %467 = vmatpush2.msra.mxu0 0.0
    %468 = vmatprep.subr.mxu0 0.0
    %469 = vmatpush2.msra.mxu0 0.0
    %470 = vmatprep.subr.mxu0 0.0
    %471 = vmatpush2.msra.mxu0 0.0
    %472 = vmatprep.subr.mxu0 0.0
    %473 = vmatpush2.msra.mxu0 0.0
    %474 = vmatprep.subr.mxu0 0.0
    %475 = vmatpush2.msra.mxu0 0.0
    %476 = vmatprep.subr.mxu0 0.0
    %477 = vmatpush2.msra.mxu0 0.0
    %478 = vmatprep.subr.mxu0 0.0
    %479 = vmatpush2.msra.mxu0 0.0
    %480 = vmatprep.subr.mxu0 0.0
    %481 = vmatpush2.msra.mxu0 0.0
    %482 = vmatprep.subr.mxu0 0.0
    %483 = vmatpush2.msra.mxu0 0.0
    %484 = vmatprep.subr.mxu0 0.0
    %485 = vmatpush2.msra.mxu0 0.0
    %486 = vmatprep.subr.mxu0 0.0
    %487 = vmatpush2.msra.mxu0 0.0
    %488 = vmatprep.subr.mxu0 0.0
    %489 = vmatpush2.msra.mxu0 0.0
    %490 = vmatprep.subr.mxu0 0.0
    %491 = vmatpush2.msra.mxu0 0.0
    %492 = vmatprep.mubr.f32.mxu0 0.0
    %493 = vmatmul.mubr.f32.gmra.mxu0 %v426
    %v494 = vpop.f32.mrf.mxu0
    %v495 = vadd.f32 0.0, %v494
    %v496 = vpop.f32.mrf.mxu0
    %497 = vdwg.mxu0
    %v498 = vadd.f32 %v218, %v495
    %v499 = vxor.u32 %v498, 2147483648
    %v500 = vmul.f32 %v499, 1.442695
    %v501 = vpow.pop %v500
    %v502 = vadd.f32 %v501, 1.0
    %v503 = vrcp.pop %v502
    %v504 = vmul.f32 1.0, %v503
    %v505 = vtanh.pop %v498
    %v506 = vmul.f32 %v504, %v416
    %508 = vrot.lane.b32.xlu0 %v505, 64
    %v509 = vpop.permute.xlu0 %508
    %v511 = vmul.f32 %v504, %v509
    %513 = vrot.lane.b32.xlu0 %v511, 32
    %v514 = vpop.permute.xlu0 %513
    %v516 = vadd.f32 %v506, %v514
    %v517 = vtanh.pop %v516
    %519 = vrot.lane.b32.xlu0 %v517, 64
    %v520 = vpop.permute.xlu0 %519
    %v522 = vmul.f32 %v504, %v520
    %524 = vrot.lane.b32.xlu0 %v522, 32
    %v525 = vpop.permute.xlu0 %524
    %v526 = vsel %vm224, %v525, 0
    %528 = vmatprep.subr.mxu0 0.0
    %529 = vmatpush1.msra.mxu0 0.0
    %530 = vmatprep.subr.mxu0 0.0
    %531 = vmatpush1.msra.mxu0 0.0
    %532 = vmatprep.subr.mxu0 0.0
    %533 = vmatpush1.msra.mxu0 0.0
    %534 = vmatprep.subr.mxu0 0.0
    %535 = vmatpush1.msra.mxu0 0.0
    %536 = vmatprep.subr.mxu0 0.0
    %537 = vmatpush1.msra.mxu0 0.0
    %538 = vmatprep.subr.mxu0 0.0
    %539 = vmatpush1.msra.mxu0 0.0
    %540 = vmatprep.subr.mxu0 0.0
    %541 = vmatpush1.msra.mxu0 0.0
    %542 = vmatprep.subr.mxu0 0.0
    %543 = vmatpush1.msra.mxu0 0.0
    %544 = vmatprep.subr.mxu0 0.0
    %545 = vmatpush1.msra.mxu0 0.0
    %546 = vmatprep.subr.mxu0 0.0
    %547 = vmatpush1.msra.mxu0 0.0
    %548 = vmatprep.subr.mxu0 0.0
    %549 = vmatpush1.msra.mxu0 0.0
    %550 = vmatprep.subr.mxu0 0.0
    %551 = vmatpush1.msra.mxu0 0.0
    %552 = vmatprep.subr.mxu0 0.0
    %553 = vmatpush1.msra.mxu0 %v76
    %554 = vmatprep.subr.mxu0 0.0
    %555 = vmatpush1.msra.mxu0 %v75
    %556 = vmatprep.subr.mxu0 0.0
    %557 = vmatpush1.msra.mxu0 %v74
    %558 = vmatprep.subr.mxu0 0.0
    %559 = vmatpush1.msra.mxu0 %v73
    %560 = vmatprep.subr.mxu0 0.0
    %561 = vmatpush2.msra.mxu0 0.0
    %562 = vmatprep.subr.mxu0 0.0
    %563 = vmatpush2.msra.mxu0 0.0
    %564 = vmatprep.subr.mxu0 0.0
    %565 = vmatpush2.msra.mxu0 0.0
    %566 = vmatprep.subr.mxu0 0.0
    %567 = vmatpush2.msra.mxu0 0.0
    %568 = vmatprep.subr.mxu0 0.0
    %569 = vmatpush2.msra.mxu0 0.0
    %570 = vmatprep.subr.mxu0 0.0
    %571 = vmatpush2.msra.mxu0 0.0
    %572 = vmatprep.subr.mxu0 0.0
    %573 = vmatpush2.msra.mxu0 0.0
    %574 = vmatprep.subr.mxu0 0.0
    %575 = vmatpush2.msra.mxu0 0.0
    %576 = vmatprep.subr.mxu0 0.0
    %577 = vmatpush2.msra.mxu0 0.0
    %578 = vmatprep.subr.mxu0 0.0
    %579 = vmatpush2.msra.mxu0 0.0
    %580 = vmatprep.subr.mxu0 0.0
    %581 = vmatpush2.msra.mxu0 0.0
    %582 = vmatprep.subr.mxu0 0.0
    %583 = vmatpush2.msra.mxu0 0.0
    %584 = vmatprep.subr.mxu0 0.0
    %585 = vmatpush2.msra.mxu0 0.0
    %586 = vmatprep.subr.mxu0 0.0
    %587 = vmatpush2.msra.mxu0 0.0
    %588 = vmatprep.subr.mxu0 0.0
    %589 = vmatpush2.msra.mxu0 0.0
    %590 = vmatprep.subr.mxu0 0.0
    %591 = vmatpush2.msra.mxu0 0.0
    %592 = vmatprep.mubr.f32.mxu0 0.0
    %593 = vmatmul.mubr.f32.gmra.mxu0 %v526
    %v594 = vpop.f32.mrf.mxu0
    %v595 = vadd.f32 0.0, %v594
    %v596 = vpop.f32.mrf.mxu0
    %597 = vdwg.mxu0
    %v598 = vadd.f32 %v219, %v595
    %v599 = vxor.u32 %v598, 2147483648
    %v600 = vmul.f32 %v599, 1.442695
    %v601 = vpow.pop %v600
    %v602 = vadd.f32 %v601, 1.0
    %v603 = vrcp.pop %v602
    %v604 = vmul.f32 1.0, %v603
    %v605 = vtanh.pop %v598
    %v606 = vmul.f32 %v604, %v516
    %608 = vrot.lane.b32.xlu0 %v605, 64
    %v609 = vpop.permute.xlu0 %608
    %v611 = vmul.f32 %v604, %v609
    %613 = vrot.lane.b32.xlu0 %v611, 32
    %v614 = vpop.permute.xlu0 %613
    %v616 = vadd.f32 %v606, %v614
    %v617 = vtanh.pop %v616
    %619 = vrot.lane.b32.xlu0 %v617, 64
    %v620 = vpop.permute.xlu0 %619
    %v622 = vmul.f32 %v604, %v620
    %624 = vrot.lane.b32.xlu0 %v622, 32
    %v625 = vpop.permute.xlu0 %624
    %v626 = vsel %vm224, %v625, 0
    %628 = vmatprep.subr.mxu0 0.0
    %629 = vmatpush1.msra.mxu0 0.0
    %630 = vmatprep.subr.mxu0 0.0
    %631 = vmatpush1.msra.mxu0 0.0
    %632 = vmatprep.subr.mxu0 0.0
    %633 = vmatpush1.msra.mxu0 0.0
    %634 = vmatprep.subr.mxu0 0.0
    %635 = vmatpush1.msra.mxu0 0.0
    %636 = vmatprep.subr.mxu0 0.0
    %637 = vmatpush1.msra.mxu0 0.0
    %638 = vmatprep.subr.mxu0 0.0
    %639 = vmatpush1.msra.mxu0 0.0
    %640 = vmatprep.subr.mxu0 0.0
    %641 = vmatpush1.msra.mxu0 0.0
    %642 = vmatprep.subr.mxu0 0.0
    %643 = vmatpush1.msra.mxu0 0.0
    %644 = vmatprep.subr.mxu0 0.0
    %645 = vmatpush1.msra.mxu0 0.0
    %646 = vmatprep.subr.mxu0 0.0
    %647 = vmatpush1.msra.mxu0 0.0
    %648 = vmatprep.subr.mxu0 0.0
    %649 = vmatpush1.msra.mxu0 0.0
    %650 = vmatprep.subr.mxu0 0.0
    %651 = vmatpush1.msra.mxu0 0.0
    %652 = vmatprep.subr.mxu0 0.0
    %653 = vmatpush1.msra.mxu0 %v76
    %654 = vmatprep.subr.mxu0 0.0
    %655 = vmatpush1.msra.mxu0 %v75
    %656 = vmatprep.subr.mxu0 0.0
    %657 = vmatpush1.msra.mxu0 %v74
    %658 = vmatprep.subr.mxu0 0.0
    %659 = vmatpush1.msra.mxu0 %v73
    %660 = vmatprep.subr.mxu0 0.0
    %661 = vmatpush2.msra.mxu0 0.0
    %662 = vmatprep.subr.mxu0 0.0
    %663 = vmatpush2.msra.mxu0 0.0
    %664 = vmatprep.subr.mxu0 0.0
    %665 = vmatpush2.msra.mxu0 0.0
    %666 = vmatprep.subr.mxu0 0.0
    %667 = vmatpush2.msra.mxu0 0.0
    %668 = vmatprep.subr.mxu0 0.0
    %669 = vmatpush2.msra.mxu0 0.0
    %670 = vmatprep.subr.mxu0 0.0
    %671 = vmatpush2.msra.mxu0 0.0
    %672 = vmatprep.subr.mxu0 0.0
    %673 = vmatpush2.msra.mxu0 0.0
    %674 = vmatprep.subr.mxu0 0.0
    %675 = vmatpush2.msra.mxu0 0.0
    %676 = vmatprep.subr.mxu0 0.0
    %677 = vmatpush2.msra.mxu0 0.0
    %678 = vmatprep.subr.mxu0 0.0
    %679 = vmatpush2.msra.mxu0 0.0
    %680 = vmatprep.subr.mxu0 0.0
    %681 = vmatpush2.msra.mxu0 0.0
    %682 = vmatprep.subr.mxu0 0.0
    %683 = vmatpush2.msra.mxu0 0.0
    %684 = vmatprep.subr.mxu0 0.0
    %685 = vmatpush2.msra.mxu0 0.0
    %686 = vmatprep.subr.mxu0 0.0
    %687 = vmatpush2.msra.mxu0 0.0
    %688 = vmatprep.subr.mxu0 0.0
    %689 = vmatpush2.msra.mxu0 0.0
    %690 = vmatprep.subr.mxu0 0.0
    %691 = vmatpush2.msra.mxu0 0.0
    %692 = vmatprep.mubr.f32.mxu0 0.0
    %693 = vmatmul.mubr.f32.gmra.mxu0 %v626
    %v694 = vpop.f32.mrf.mxu0
    %v695 = vadd.f32 0.0, %v694
    %v696 = vpop.f32.mrf.mxu0
    %697 = vdwg.mxu0
    %v698 = vadd.f32 %v220, %v695
    %v699 = vxor.u32 %v698, 2147483648
    %v700 = vmul.f32 %v699, 1.442695
    %v701 = vpow.pop %v700
    %v702 = vadd.f32 %v701, 1.0
    %v703 = vrcp.pop %v702
    %v704 = vmul.f32 1.0, %v703
    %v705 = vtanh.pop %v698
    %v706 = vmul.f32 %v704, %v616
    %708 = vrot.lane.b32.xlu0 %v705, 64
    %v709 = vpop.permute.xlu0 %708
    %v711 = vmul.f32 %v704, %v709
    %713 = vrot.lane.b32.xlu0 %v711, 32
    %v714 = vpop.permute.xlu0 %713
    %v716 = vadd.f32 %v706, %v714
    %v717 = vtanh.pop %v716
    %719 = vrot.lane.b32.xlu0 %v717, 64
    %v720 = vpop.permute.xlu0 %719
    %v722 = vmul.f32 %v704, %v720
    %724 = vrot.lane.b32.xlu0 %v722, 32
    %v725 = vpop.permute.xlu0 %724
    %v726 = vsel %vm224, %v725, 0
    %728 = vmatprep.subr.mxu0 0.0
    %729 = vmatpush1.msra.mxu0 0.0
    %730 = vmatprep.subr.mxu0 0.0
    %731 = vmatpush1.msra.mxu0 0.0
    %732 = vmatprep.subr.mxu0 0.0
    %733 = vmatpush1.msra.mxu0 0.0
    %734 = vmatprep.subr.mxu0 0.0
    %735 = vmatpush1.msra.mxu0 0.0
    %736 = vmatprep.subr.mxu0 0.0
    %737 = vmatpush1.msra.mxu0 0.0
    %738 = vmatprep.subr.mxu0 0.0
    %739 = vmatpush1.msra.mxu0 0.0
    %740 = vmatprep.subr.mxu0 0.0
    %741 = vmatpush1.msra.mxu0 0.0
    %742 = vmatprep.subr.mxu0 0.0
    %743 = vmatpush1.msra.mxu0 0.0
    %744 = vmatprep.subr.mxu0 0.0
    %745 = vmatpush1.msra.mxu0 0.0
    %746 = vmatprep.subr.mxu0 0.0
    %747 = vmatpush1.msra.mxu0 0.0
    %748 = vmatprep.subr.mxu0 0.0
    %749 = vmatpush1.msra.mxu0 0.0
    %750 = vmatprep.subr.mxu0 0.0
    %751 = vmatpush1.msra.mxu0 0.0
    %752 = vmatprep.subr.mxu0 0.0
    %753 = vmatpush1.msra.mxu0 %v76
    %754 = vmatprep.subr.mxu0 0.0
    %755 = vmatpush1.msra.mxu0 %v75
    %756 = vmatprep.subr.mxu0 0.0
    %757 = vmatpush1.msra.mxu0 %v74
    %758 = vmatprep.subr.mxu0 0.0
    %759 = vmatpush1.msra.mxu0 %v73
    %760 = vmatprep.subr.mxu0 0.0
    %761 = vmatpush2.msra.mxu0 0.0
    %762 = vmatprep.subr.mxu0 0.0
    %763 = vmatpush2.msra.mxu0 0.0
    %764 = vmatprep.subr.mxu0 0.0
    %765 = vmatpush2.msra.mxu0 0.0
    %766 = vmatprep.subr.mxu0 0.0
    %767 = vmatpush2.msra.mxu0 0.0
    %768 = vmatprep.subr.mxu0 0.0
    %769 = vmatpush2.msra.mxu0 0.0
    %770 = vmatprep.subr.mxu0 0.0
    %771 = vmatpush2.msra.mxu0 0.0
    %772 = vmatprep.subr.mxu0 0.0
    %773 = vmatpush2.msra.mxu0 0.0
    %774 = vmatprep.subr.mxu0 0.0
    %775 = vmatpush2.msra.mxu0 0.0
    %776 = vmatprep.subr.mxu0 0.0
    %777 = vmatpush2.msra.mxu0 0.0
    %778 = vmatprep.subr.mxu0 0.0
    %779 = vmatpush2.msra.mxu0 0.0
    %780 = vmatprep.subr.mxu0 0.0
    %781 = vmatpush2.msra.mxu0 0.0
    %782 = vmatprep.subr.mxu0 0.0
    %783 = vmatpush2.msra.mxu0 0.0
    %784 = vmatprep.subr.mxu0 0.0
    %785 = vmatpush2.msra.mxu0 0.0
    %786 = vmatprep.subr.mxu0 0.0
    %787 = vmatpush2.msra.mxu0 0.0
    %788 = vmatprep.subr.mxu0 0.0
    %789 = vmatpush2.msra.mxu0 0.0
    %790 = vmatprep.subr.mxu0 0.0
    %791 = vmatpush2.msra.mxu0 0.0
    %792 = vmatprep.mubr.f32.mxu0 0.0
    %793 = vmatmul.mubr.f32.gmra.mxu0 %v726
    %v794 = vpop.f32.mrf.mxu0
    %v795 = vadd.f32 0.0, %v794
    %v796 = vpop.f32.mrf.mxu0
    %797 = vdwg.mxu0
    %v798 = vadd.f32 %v221, %v795
    %v799 = vxor.u32 %v798, 2147483648
    %v800 = vmul.f32 %v799, 1.442695
    %v801 = vpow.pop %v800
    %v802 = vadd.f32 %v801, 1.0
    %v803 = vrcp.pop %v802
    %v804 = vmul.f32 1.0, %v803
    %v805 = vtanh.pop %v798
    %v806 = vmul.f32 %v804, %v716
    %808 = vrot.lane.b32.xlu0 %v805, 64
    %v809 = vpop.permute.xlu0 %808
    %v811 = vmul.f32 %v804, %v809
    %813 = vrot.lane.b32.xlu0 %v811, 32
    %v814 = vpop.permute.xlu0 %813
    %v816 = vadd.f32 %v806, %v814
    %v817 = vtanh.pop %v816
    %819 = vrot.lane.b32.xlu0 %v817, 64
    %v820 = vpop.permute.xlu0 %819
    %v822 = vmul.f32 %v804, %v820
    %824 = vrot.lane.b32.xlu0 %v822, 32
    %v825 = vpop.permute.xlu0 %824
    %v826 = vsel %vm224, %v825, 0
    %828 = vmatprep.subr.mxu0 0.0
    %829 = vmatpush1.msra.mxu0 0.0
    %830 = vmatprep.subr.mxu0 0.0
    %831 = vmatpush1.msra.mxu0 0.0
    %832 = vmatprep.subr.mxu0 0.0
    %833 = vmatpush1.msra.mxu0 0.0
    %834 = vmatprep.subr.mxu0 0.0
    %835 = vmatpush1.msra.mxu0 0.0
    %836 = vmatprep.subr.mxu0 0.0
    %837 = vmatpush1.msra.mxu0 0.0
    %838 = vmatprep.subr.mxu0 0.0
    %839 = vmatpush1.msra.mxu0 0.0
    %840 = vmatprep.subr.mxu0 0.0
    %841 = vmatpush1.msra.mxu0 0.0
    %842 = vmatprep.subr.mxu0 0.0
    %843 = vmatpush1.msra.mxu0 0.0
    %844 = vmatprep.subr.mxu0 0.0
    %845 = vmatpush1.msra.mxu0 0.0
    %846 = vmatprep.subr.mxu0 0.0
    %847 = vmatpush1.msra.mxu0 0.0
    %848 = vmatprep.subr.mxu0 0.0
    %849 = vmatpush1.msra.mxu0 0.0
    %850 = vmatprep.subr.mxu0 0.0
    %851 = vmatpush1.msra.mxu0 0.0
    %852 = vmatprep.subr.mxu0 0.0
    %853 = vmatpush1.msra.mxu0 %v76
    %854 = vmatprep.subr.mxu0 0.0
    %855 = vmatpush1.msra.mxu0 %v75
    %856 = vmatprep.subr.mxu0 0.0
    %857 = vmatpush1.msra.mxu0 %v74
    %858 = vmatprep.subr.mxu0 0.0
    %859 = vmatpush1.msra.mxu0 %v73
    %860 = vmatprep.subr.mxu0 0.0
    %861 = vmatpush2.msra.mxu0 0.0
    %862 = vmatprep.subr.mxu0 0.0
    %863 = vmatpush2.msra.mxu0 0.0
    %864 = vmatprep.subr.mxu0 0.0
    %865 = vmatpush2.msra.mxu0 0.0
    %866 = vmatprep.subr.mxu0 0.0
    %867 = vmatpush2.msra.mxu0 0.0
    %868 = vmatprep.subr.mxu0 0.0
    %869 = vmatpush2.msra.mxu0 0.0
    %870 = vmatprep.subr.mxu0 0.0
    %871 = vmatpush2.msra.mxu0 0.0
    %872 = vmatprep.subr.mxu0 0.0
    %873 = vmatpush2.msra.mxu0 0.0
    %874 = vmatprep.subr.mxu0 0.0
    %875 = vmatpush2.msra.mxu0 0.0
    %876 = vmatprep.subr.mxu0 0.0
    %877 = vmatpush2.msra.mxu0 0.0
    %878 = vmatprep.subr.mxu0 0.0
    %879 = vmatpush2.msra.mxu0 0.0
    %880 = vmatprep.subr.mxu0 0.0
    %881 = vmatpush2.msra.mxu0 0.0
    %882 = vmatprep.subr.mxu0 0.0
    %883 = vmatpush2.msra.mxu0 0.0
    %884 = vmatprep.subr.mxu0 0.0
    %885 = vmatpush2.msra.mxu0 0.0
    %886 = vmatprep.subr.mxu0 0.0
    %887 = vmatpush2.msra.mxu0 0.0
    %888 = vmatprep.subr.mxu0 0.0
    %889 = vmatpush2.msra.mxu0 0.0
    %890 = vmatprep.subr.mxu0 0.0
    %891 = vmatpush2.msra.mxu0 0.0
    %892 = vmatprep.mubr.f32.mxu0 0.0
    %893 = vmatmul.mubr.f32.gmra.mxu0 %v826
    %v894 = vpop.f32.mrf.mxu0
    %v895 = vadd.f32 0.0, %v894
    %v896 = vpop.f32.mrf.mxu0
    %897 = vdwg.mxu0
    %v898 = vadd.f32 %v222, %v895
    %v899 = vxor.u32 %v898, 2147483648
    %v900 = vmul.f32 %v899, 1.442695
    %v901 = vpow.pop %v900
    %v902 = vadd.f32 %v901, 1.0
    %v903 = vrcp.pop %v902
    %v904 = vmul.f32 1.0, %v903
    %v905 = vtanh.pop %v898
    %v906 = vmul.f32 %v904, %v816
    %908 = vrot.lane.b32.xlu0 %v905, 64
    %v909 = vpop.permute.xlu0 %908
    %v911 = vmul.f32 %v904, %v909
    %913 = vrot.lane.b32.xlu0 %v911, 32
    %v914 = vpop.permute.xlu0 %913
    %v916 = vadd.f32 %v906, %v914
    %v917 = vtanh.pop %v916
    %919 = vrot.lane.b32.xlu0 %v917, 64
    %v920 = vpop.permute.xlu0 %919
    %v922 = vmul.f32 %v904, %v920
    %924 = vrot.lane.b32.xlu0 %v922, 32
    %v925 = vpop.permute.xlu0 %924
    %v926 = vsel %vm224, %v925, 0
    %928 = vmatprep.subr.mxu0 0.0
    %929 = vmatpush1.msra.mxu0 0.0
    %930 = vmatprep.subr.mxu0 0.0
    %931 = vmatpush1.msra.mxu0 0.0
    %932 = vmatprep.subr.mxu0 0.0
    %933 = vmatpush1.msra.mxu0 0.0
    %934 = vmatprep.subr.mxu0 0.0
    %935 = vmatpush1.msra.mxu0 0.0
    %936 = vmatprep.subr.mxu0 0.0
    %937 = vmatpush1.msra.mxu0 0.0
    %938 = vmatprep.subr.mxu0 0.0
    %939 = vmatpush1.msra.mxu0 0.0
    %940 = vmatprep.subr.mxu0 0.0
    %941 = vmatpush1.msra.mxu0 0.0
    %942 = vmatprep.subr.mxu0 0.0
    %943 = vmatpush1.msra.mxu0 0.0
    %944 = vmatprep.subr.mxu0 0.0
    %945 = vmatpush1.msra.mxu0 0.0
    %946 = vmatprep.subr.mxu0 0.0
    %947 = vmatpush1.msra.mxu0 0.0
    %948 = vmatprep.subr.mxu0 0.0
    %949 = vmatpush1.msra.mxu0 0.0
    %950 = vmatprep.subr.mxu0 0.0
    %951 = vmatpush1.msra.mxu0 0.0
    %952 = vmatprep.subr.mxu0 0.0
    %953 = vmatpush1.msra.mxu0 %v76
    %954 = vmatprep.subr.mxu0 0.0
    %955 = vmatpush1.msra.mxu0 %v75
    %956 = vmatprep.subr.mxu0 0.0
    %957 = vmatpush1.msra.mxu0 %v74
    %958 = vmatprep.subr.mxu0 0.0
    %959 = vmatpush1.msra.mxu0 %v73
    %960 = vmatprep.subr.mxu0 0.0
    %961 = vmatpush2.msra.mxu0 0.0
    %962 = vmatprep.subr.mxu0 0.0
    %963 = vmatpush2.msra.mxu0 0.0
    %964 = vmatprep.subr.mxu0 0.0
    %965 = vmatpush2.msra.mxu0 0.0
    %966 = vmatprep.subr.mxu0 0.0
    %967 = vmatpush2.msra.mxu0 0.0
    %968 = vmatprep.subr.mxu0 0.0
    %969 = vmatpush2.msra.mxu0 0.0
    %970 = vmatprep.subr.mxu0 0.0
    %971 = vmatpush2.msra.mxu0 0.0
    %972 = vmatprep.subr.mxu0 0.0
    %973 = vmatpush2.msra.mxu0 0.0
    %974 = vmatprep.subr.mxu0 0.0
    %975 = vmatpush2.msra.mxu0 0.0
    %976 = vmatprep.subr.mxu0 0.0
    %977 = vmatpush2.msra.mxu0 0.0
    %978 = vmatprep.subr.mxu0 0.0
    %979 = vmatpush2.msra.mxu0 0.0
    %980 = vmatprep.subr.mxu0 0.0
    %981 = vmatpush2.msra.mxu0 0.0
    %982 = vmatprep.subr.mxu0 0.0
    %983 = vmatpush2.msra.mxu0 0.0
    %984 = vmatprep.subr.mxu0 0.0
    %985 = vmatpush2.msra.mxu0 0.0
    %986 = vmatprep.subr.mxu0 0.0
    %987 = vmatpush2.msra.mxu0 0.0
    %988 = vmatprep.subr.mxu0 0.0
    %989 = vmatpush2.msra.mxu0 0.0
    %990 = vmatprep.subr.mxu0 0.0
    %991 = vmatpush2.msra.mxu0 0.0
    %992 = vmatprep.mubr.f32.mxu0 0.0
    %993 = vmatmul.mubr.f32.gmra.mxu0 %v926
    %v994 = vpop.f32.mrf.mxu0
    %v995 = vadd.f32 0.0, %v994
    %v996 = vpop.f32.mrf.mxu0
    %997 = vdwg.mxu0
    %v998 = vadd.f32 %v223, %v995
    %v999 = vxor.u32 %v998, 2147483648
    %v1000 = vmul.f32 %v999, 1.442695
    %v1001 = vpow.pop %v1000
    %v1002 = vadd.f32 %v1001, 1.0
    %v1003 = vrcp.pop %v1002
    %v1004 = vmul.f32 1.0, %v1003
    %v1005 = vtanh.pop %v998
    %v1006 = vmul.f32 %v1004, %v916
    %1008 = vrot.lane.b32.xlu0 %v1005, 64
    %v1009 = vpop.permute.xlu0 %1008
    %v1011 = vmul.f32 %v1004, %v1009
    %1013 = vrot.lane.b32.xlu0 %v1011, 32
    %v1014 = vpop.permute.xlu0 %1013
    %v1016 = vadd.f32 %v1006, %v1014
    %v1017 = vtanh.pop %v1016
    %1019 = vrot.lane.b32.xlu0 %v1017, 64
    %v1020 = vpop.permute.xlu0 %1019
    %v1022 = vmul.f32 %v1004, %v1020
    %1024 = vrot.lane.b32.xlu0 %v1022, 32
    %v1025 = vpop.permute.xlu0 %1024
    %1027 = vst.msk [vmem:[#allocation10] sm:$0xff] %vm224, %v1025
    // Predicated region
    $region34: #{tpu_custom_call.1} parent=1 // pred_check
      _
    $region35: #{tpu_custom_call.1} parent=1 // pred_check_branch
      %1029 = sbr.rel (0) target = $region37
    $region36: #{tpu_custom_call.1} parent=1 // pred_region
      %s1031 = ssub.s32 128, 128
      %1032 = vsyncadd [#allocation4], %s1031
      %s1034 = sshll.u32 [#allocation10], 4
      %s1035 = int_to_ptr.vmem [resolvable:$true] %s1034
      %1037 = dma.vmem_to_hbm [thread:$0]  %s1035, 128, %s4, [#allocation4]
    $region37: #{tpu_custom_call.1} parent=1 // pred_fallthru
      _
    // Predicated region
    $region38: #{tpu_custom_call.1} parent=1 // pred_check
      _
    $region39: #{tpu_custom_call.1} parent=1 // pred_check_branch
      %1039 = sbr.rel (0) target = $region41
    $region40: #{tpu_custom_call.1} parent=1 // pred_region
      %1040 = dma.done [#allocation4], 128
    $region41: #{tpu_custom_call.1} parent=1 // pred_fallthru
      _
    %1041 = vsyncpa [#allocation3], 1
    %1042 = vsyncpa [#allocation6], 1
    %1043 = vsyncpa [#allocation9], 1
    %1044 = vsyncpa [#allocation4], 1

</llo_original>
